<compile_context>
chip_gen: v5e
topology: v5e:2x2
jax: 0.10.0
libtpu: 0.0.40
codegen_flags: <defaults>
</compile_context>

<pallas_src>
import jax
import jax.numpy as jnp
import numpy as np
from jax.experimental import pallas as pl
from jax.experimental.pallas import tpu as pltpu


# ------------------------------------------------------------------
# Parameter / buffer setup (glue, plain JAX -- deterministic, no files)
# ------------------------------------------------------------------
def make_positional_encoding(max_len: int, d_model: int, dtype=jnp.float32):
    """Replicates the PyTorch __init__ buffer `pe`, shape (max_len, 1, d_model).

    Build the table once in the activation dtype (review item: no per-forward
    slice+cast pass).  Note: for bf16/fp16 activations PyTorch would promote
    the add to fp32 (pe buffer is fp32); storing pe in the activation dtype
    changes low-precision numerics slightly -- acceptable for PE values.
    """
    assert d_model % 2 == 0, "d_model must be even (as in the reference module)"
    position = jnp.arange(max_len, dtype=jnp.float32)[:, None]            # (L, 1)
    div_term = jnp.exp(
        jnp.arange(0, d_model, 2, dtype=jnp.float32)
        * (-jnp.log(jnp.float32(10000.0)) / d_model)
    )                                                                      # (D/2,)
    pe = jnp.zeros((max_len, d_model), dtype=jnp.float32)
    pe = pe.at[:, 0::2].set(jnp.sin(position * div_term))
    pe = pe.at[:, 1::2].set(jnp.cos(position * div_term))
    return pe[:, None, :].astype(dtype)                                    # (L, 1, D)


# ------------------------------------------------------------------
# Pallas kernel: broadcast elementwise add (the forward hot path)
# ------------------------------------------------------------------
def _pe_add_kernel(x_ref, pe_ref, o_ref):
    # x_ref / o_ref : (tile_s, B, D) VMEM tiles
    # pe_ref        : (tile_s, 1, D) VMEM tile -> broadcast over the batch
    #                 (sublane) axis; dtype cast (if any) is per-tile on VPU.
    x = x_ref[...]
    pe = pe_ref[...].astype(x.dtype)
    o_ref[...] = x + pe


# ------------------------------------------------------------------
# Tiling helper
# ------------------------------------------------------------------
_TARGET_TILE_BYTES = 8 * 1024 * 1024   # ~8 MiB x block (review: 6-8 MiB for v7x)
_VMEM_LIMIT_BYTES = 48 * 1024 * 1024   # 2 bufs x (x + out) ~= 32 MiB + headroom


def _choose_tile_s(S: int, row_bytes: int) -> int:
    """Seq rows per block: ~_TARGET_TILE_BYTES of x per block, a multiple of 8
    (sublanes), and capped so there are at least ~4 grid steps when S allows
    (keeps the 'parallel' grid axis splittable across TensorCores and the
    DMA pipeline fed)."""
    if S <= 8:
        return S
    rows = (_TARGET_TILE_BYTES // max(1, row_bytes)) // 8 * 8
    rows = max(8, rows)
    cap = (((S + 3) // 4) + 7) // 8 * 8          # round_up(cdiv(S, 4), 8)
    rows = max(8, min(rows, cap))
    return min(rows, S)


# ------------------------------------------------------------------
# Forward wrapper
# ------------------------------------------------------------------
def positional_encoding_forward(x, pe_table):
    """x: (seq, batch, d_model); pe_table: (max_len, 1, d_model) -- PyTorch buffer layout."""
    S, B, D = x.shape
    max_len, one, d_pe = pe_table.shape
    assert one == 1 and d_pe == D, "pe_table must be (max_len, 1, d_model)"
    if S > max_len:
        raise ValueError(f"seq_len {S} exceeds max_len {max_len}")

    itemsize = jnp.dtype(x.dtype).itemsize
    tile_s = _choose_tile_s(S, B * D * itemsize)
    n_blk = pl.cdiv(S, tile_s)            # ragged last block clipped by Pallas

    return pl.pallas_call(
        _pe_add_kernel,
        out_shape=jax.ShapeDtypeStruct((S, B, D), x.dtype),
        grid_spec=pl.GridSpec(
            grid=(n_blk,),
            in_specs=[
                pl.BlockSpec((tile_s, B, D), lambda i: (i, 0, 0)),   # x tile
                pl.BlockSpec((tile_s, 1, D), lambda i: (i, 0, 0)),   # pe tile (no slice/cast in HBM)
            ],
            out_specs=pl.BlockSpec((tile_s, B, D), lambda i: (i, 0, 0)),
        ),
        compiler_params=pltpu.CompilerParams(
            dimension_semantics=("parallel",),   # independent blocks -> megacore on v7x
            vmem_limit_bytes=_VMEM_LIMIT_BYTES,
        ),
        input_output_aliases={0: 0},             # in-place x += pe
    )(x, pe_table)


# ------------------------------------------------------------------
# Demo / correctness checks
# ------------------------------------------------------------------
if __name__ == "__main__":
    max_len = 5000

    def ref_forward(x, pe_table):
        # Pure-JAX reference mirroring the PyTorch forward exactly.
        return x + pe_table[: x.shape[0]]

    key = jax.random.PRNGKey(0)
    k0, k1, k2 = jax.random.split(key, 3)

    # 1) Primary small demo shape (seq=8, batch=2, d_model=32), single block.
    seq_len, batch, d_model = 8, 2, 32
    pe_table_32 = make_positional_encoding(max_len, d_model)
    x = jax.random.normal(k0, (seq_len, batch, d_model), dtype=jnp.float32)
    out = jax.block_until_ready(positional_encoding_forward(x, pe_table_32))
    np.testing.assert_allclose(np.asarray(out),
                               np.asarray(ref_forward(x, pe_table_32)),
                               rtol=1e-6, atol=1e-6)

    # 2) Ragged multi-block case (seq not divisible by the tile), lane-dense
    #    d_model=128 -> exercises ragged-block clipping, aliasing, megacore grid.
    x2 = jax.random.normal(k1, (300, 4, 128), dtype=jnp.float32)
    pe_table_128 = make_positional_encoding(max_len, 128)
    out2 = jax.block_until_ready(positional_encoding_forward(x2, pe_table_128))
    np.testing.assert_allclose(np.asarray(out2),
                               np.asarray(ref_forward(x2, pe_table_128)),
                               rtol=1e-6, atol=1e-6)

    # 3) Narrow-D ragged case (masked-store path, several grid steps).
    x3 = jax.random.normal(k2, (40, 2, 32), dtype=jnp.float32)
    out3 = jax.block_until_ready(positional_encoding_forward(x3, pe_table_32))
    np.testing.assert_allclose(np.asarray(out3),
                               np.asarray(ref_forward(x3, pe_table_32)),
                               rtol=1e-6, atol=1e-6)

    print("KERNEL_OK")
</pallas_src>

<mosaic_0001>
module attributes {stable_mosaic.version = 11 : i64} {
  func.func @_pe_add_kernel(%arg0: i32, %arg1: memref<8x2x32xf32, #tpu.memory_space<vmem>>, %arg2: memref<8x1x32xf32, #tpu.memory_space<vmem>>, %arg3: memref<8x2x32xf32, #tpu.memory_space<vmem>>) attributes {dimension_semantics = [#tpu.dimension_semantics<parallel>], iteration_bounds = array<i64: 1>, scalar_prefetch = 0 : i64, scratch_operands = 0 : i64, tpu.core_type = #tpu.core_type<tc>, window_params = [{transform_indices = @transform_0, window_bounds = array<i64: 8, 2, 32>}, {transform_indices = @transform_1, window_bounds = array<i64: 8, 1, 32>}, {transform_indices = @transform_2, window_bounds = array<i64: 8, 2, 32>}]} {
    %c0 = arith.constant 0 : index
    %c0_0 = arith.constant 0 : index
    %c0_1 = arith.constant 0 : index
    %0 = vector.load %arg1[%c0, %c0_0, %c0_1] : memref<8x2x32xf32, #tpu.memory_space<vmem>>, vector<8x2x32xf32>
    %c0_2 = arith.constant 0 : index
    %c0_3 = arith.constant 0 : index
    %c0_4 = arith.constant 0 : index
    %1 = vector.load %arg2[%c0_2, %c0_3, %c0_4] : memref<8x1x32xf32, #tpu.memory_space<vmem>>, vector<8x1x32xf32>
    %2 = vector.broadcast %1 : vector<8x1x32xf32> to vector<8x2x32xf32>
    %3 = arith.addf %0, %2 : vector<8x2x32xf32>
    %c0_5 = arith.constant 0 : index
    %c0_6 = arith.constant 0 : index
    %c0_7 = arith.constant 0 : index
    %4 = vector.load %arg3[%c0_5, %c0_6, %c0_7] : memref<8x2x32xf32, #tpu.memory_space<vmem>>, vector<8x2x32xf32>
    tpu.vector_store %arg3[%c0_5, %c0_6, %c0_7], %3 {strides = array<i32>} : memref<8x2x32xf32, #tpu.memory_space<vmem>>, vector<8x2x32xf32>,
    return
  }
  func.func @transform_0(%arg0: i32) -> (i32, i32, i32) {
    %c0_i32 = arith.constant 0 : i32
    %c0_i32_0 = arith.constant 0 : i32
    %c0_i32_1 = arith.constant 0 : i32
    return %arg0, %c0_i32, %c0_i32_0 : i32, i32, i32
  }
  func.func @transform_1(%arg0: i32) -> (i32, i32, i32) {
    %c0_i32 = arith.constant 0 : i32
    %c0_i32_0 = arith.constant 0 : i32
    %c0_i32_1 = arith.constant 0 : i32
    return %arg0, %c0_i32, %c0_i32_0 : i32, i32, i32
  }
  func.func @transform_2(%arg0: i32) -> (i32, i32, i32) {
    %c0_i32 = arith.constant 0 : i32
    %c0_i32_0 = arith.constant 0 : i32
    %c0_i32_1 = arith.constant 0 : i32
    return %arg0, %c0_i32, %c0_i32_0 : i32, i32, i32
  }
}

</mosaic_0001>

<llo_original>
// kernel: tpu_custom_call.1
$region0: #{tpu_custom_call.1}
  #allocation0 [shape = 'u32[]', space=smem, size = 0x4, offset = 0x4, fixed_abs, tag = 'smem constant byte address 0x4 - core index']
  #allocation1 [shape = 'u32[72,128]{1,0:T(1,128)}', space=vmem, size = 0x9000, scoped, tag = 'internal scratch']
  %s0 = inlined_call_operand.hbm [shape: f32[8,2,32], index: 0, kind: input, shape index: {}, may-alias: {0,2}]
  %s1 = inlined_call_operand.vmem [shape: f32[5000,1,32], index: 1, kind: input, shape index: {}]
  %s2 = inlined_call_operand.hbm [shape: f32[8,2,32], index: 2, kind: output, shape index: {}, may-alias: {0,2}]
  %s3 = sld [smem:[#allocation0]]
  $region22: #{tpu_custom_call.1} parent=0
    _
  %s5 = ssub.s32 1, %s3
  %s6 = scalar_select 0, %s5, %s3
  $region1: #{tpu_custom_call.1} parent=0
    #allocation2 [shape = 'u8[8192]{0}', space=vmem, size = 0x2000, scoped, tag = 'input window, operand 0, single buffered']
    #allocation3 [shape = 's32[1]{0}', space=sflag, size = 0x4, scoped, tag = 'scoped memory for tpu_custom_call.1']
    #allocation4 [shape = 's32[1]{0}', space=sflag, size = 0x4, scoped, tag = 'scoped memory for tpu_custom_call.1']
    #allocation5 [shape = 'u8[8192]{0}', space=vmem, size = 0x2000, scoped, tag = 'output window, operand 0, single buffered']
    %7 = vsyncpa [#allocation3], 0
    %8 = vsyncpa [#allocation4], 0
    // Predicated region
    $region2: #{tpu_custom_call.1} parent=1 // pred_check
      _
    $region3: #{tpu_custom_call.1} parent=1 // pred_check_branch
      %10 = sbr.rel (0) target = $region5
    $region4: #{tpu_custom_call.1} parent=1 // pred_region
      %12 = vsyncadd [#allocation3], 0
      %s13 = sshll.u32 %s0, 4
      %s14 = int_to_ptr.hbm [resolvable:$true] %s13
      %s15 = sshll.u32 [#allocation2], 4
      %s16 = int_to_ptr.vmem [resolvable:$true] %s15
      %21 = dma.hbm_to_vmem [thread:$0]  %s14, 256, %s16, [#allocation3], 32, 32, 2
    $region5: #{tpu_custom_call.1} parent=1 // pred_fallthru
      _
    // Predicated region
    $region6: #{tpu_custom_call.1} parent=1 // pred_check
      _
    $region7: #{tpu_custom_call.1} parent=1 // pred_check_branch
      %23 = sbr.rel (0) target = $region9
    $region8: #{tpu_custom_call.1} parent=1 // pred_region
      _
    $region9: #{tpu_custom_call.1} parent=1 // pred_fallthru
      _
    // Predicated region
    $region10: #{tpu_custom_call.1} parent=1 // pred_check
      _
    $region11: #{tpu_custom_call.1} parent=1 // pred_check_branch
      %25 = sbr.rel (0) target = $region13
    $region12: #{tpu_custom_call.1} parent=1 // pred_region
      %27 = dma.done [#allocation3], 256
    $region13: #{tpu_custom_call.1} parent=1 // pred_fallthru
      _
    %v28 = vld [vmem:[#allocation2] sm:$0x3]
    %v29 = vld [vmem:[#allocation2 + $0x2] sm:$0x3]
    %v30 = vld [vmem:[#allocation2 + $0x4] sm:$0x3]
    %v31 = vld [vmem:[#allocation2 + $0x6] sm:$0x3]
    %v32 = vld [vmem:[#allocation2 + $0x8] sm:$0x3]
    %v33 = vld [vmem:[#allocation2 + $0xa] sm:$0x3]
    %v34 = vld [vmem:[#allocation2 + $0xc] sm:$0x3]
    %v35 = vld [vmem:[#allocation2 + $0xe] sm:$0x3]
    %v36 = vld [vmem:[%s1] sm:$0x1]
    %v37 = vld [vmem:[%s1 + $0x1] sm:$0x1]
    %v38 = vld [vmem:[%s1 + $0x2] sm:$0x1]
    %v39 = vld [vmem:[%s1 + $0x3] sm:$0x1]
    %v40 = vld [vmem:[%s1 + $0x4] sm:$0x1]
    %v41 = vld [vmem:[%s1 + $0x5] sm:$0x1]
    %v42 = vld [vmem:[%s1 + $0x6] sm:$0x1]
    %v43 = vld [vmem:[%s1 + $0x7] sm:$0x1]
    %v52 = vperm.slane %v36, 0
    %v53 = vperm.slane %v37, 0
    %v54 = vperm.slane %v38, 0
    %v55 = vperm.slane %v39, 0
    %v56 = vperm.slane %v40, 0
    %v57 = vperm.slane %v41, 0
    %v58 = vperm.slane %v42, 0
    %v59 = vperm.slane %v43, 0
    %v68 = vadd.f32 %v28, %v52
    %v69 = vadd.f32 %v29, %v53
    %v70 = vadd.f32 %v30, %v54
    %v71 = vadd.f32 %v31, %v55
    %v72 = vadd.f32 %v32, %v56
    %v73 = vadd.f32 %v33, %v57
    %v74 = vadd.f32 %v34, %v58
    %v75 = vadd.f32 %v35, %v59
    %vm76 = vcmask 254976
    %77 = vst.msk [vmem:[#allocation5] sm:$0x3] %vm76, %v68
    %78 = vst.msk [vmem:[#allocation5 + $0x2] sm:$0x3] %vm76, %v69
    %79 = vst.msk [vmem:[#allocation5 + $0x4] sm:$0x3] %vm76, %v70
    %80 = vst.msk [vmem:[#allocation5 + $0x6] sm:$0x3] %vm76, %v71
    %81 = vst.msk [vmem:[#allocation5 + $0x8] sm:$0x3] %vm76, %v72
    %82 = vst.msk [vmem:[#allocation5 + $0xa] sm:$0x3] %vm76, %v73
    %83 = vst.msk [vmem:[#allocation5 + $0xc] sm:$0x3] %vm76, %v74
    %84 = vst.msk [vmem:[#allocation5 + $0xe] sm:$0x3] %vm76, %v75
    // Predicated region
    $region14: #{tpu_custom_call.1} parent=1 // pred_check
      _
    $region15: #{tpu_custom_call.1} parent=1 // pred_check_branch
      %86 = sbr.rel (0) target = $region17
    $region16: #{tpu_custom_call.1} parent=1 // pred_region
      %88 = vsyncadd [#allocation4], 0
      %s89 = sshll.u32 [#allocation5], 4
      %s90 = int_to_ptr.vmem [resolvable:$true] %s89
      %s91 = sshll.u32 %s2, 4
      %s92 = int_to_ptr.hbm [resolvable:$true] %s91
      %97 = dma.vmem_to_hbm [thread:$0]  %s90, 256, %s92, [#allocation4], 32, 32, 2
    $region17: #{tpu_custom_call.1} parent=1 // pred_fallthru
      _
    // Predicated region
    $region18: #{tpu_custom_call.1} parent=1 // pred_check
      _
    $region19: #{tpu_custom_call.1} parent=1 // pred_check_branch
      %99 = sbr.rel (0) target = $region21
    $region20: #{tpu_custom_call.1} parent=1 // pred_region
      %101 = dma.done [#allocation4], 256
    $region21: #{tpu_custom_call.1} parent=1 // pred_fallthru
      _
    %102 = vsyncpa [#allocation3], 1
    %103 = vsyncpa [#allocation4], 1

</llo_original>
